<compile_context>
chip_gen: v7x
topology: tpu7x:2x2x1
jax: 0.10.0
libtpu: 0.0.40
codegen_flags: <defaults>
</compile_context>

<pallas_src>
import functools
import math

import jax
import jax.numpy as jnp
from jax.experimental import pallas as pl
from jax.experimental.pallas import tpu as pltpu


_TILE_VMEM_BUDGET_BYTES = 16 << 20   # target per-grid-step working set (safe on v7x's 64 MiB)
_VMEM_LIMIT_BYTES = 40 << 20         # scoped-VMEM limit: above v5e (16 MiB) / v6e,v7x (32 MiB)
                                     # defaults, below v7x's 64 MiB physical VMEM.


def _round_up(v, m):
    return ((v + m - 1) // m) * m


def _pick_segments_per_tile(N, L, per_lane_bytes, budget_bytes):
    """Segments (= batch elements) per grid step.

    Largest S such that:
      * the ~per-step VMEM working set  S * L * per_lane_bytes  fits the budget,
      * S*L is a multiple of 128 lanes (dense vst, no masked partial stores),
      * the grid keeps >= 2 steps whenever there is enough real data (v7x megacore).
    """
    S_cap = max(1, budget_bytes // (per_lane_bytes * L))        # VMEM bound on segments/tile
    S_unit = 128 // math.gcd(L, 128)                            # smallest lane-dense S
    if S_unit > S_cap:
        # TODO(synk): pathological case (huge L vs. tiny budget): the tile cannot be both
        # lane-dense and within budget; fall back to the budget-bound (masked-store) tile.
        return S_cap
    S_all = -(-N // S_unit) * S_unit                            # all data in one dense tile
    S = min((S_cap // S_unit) * S_unit, S_all)
    if N > S_unit:                                              # enough data for >= 2 dense tiles
        S = min(S, ((N - 1) // S_unit) * S_unit)                # -> grid >= 2 steps
    return max(S, S_unit)


def _resblock_kernel(x_ref, w1_ref, b1_ref, w2_ref, b2_ref, w3_ref, b3_ref, out_ref, *,
                     K, d, L, C_out_p, pad1, pad2, pad3, use_conv3, fuse13, conv2_on_mxu):
    NL = out_ref.shape[1]              # lanes in this tile = (segments per tile) * L
    x = x_ref[...]                     # (C_in_p, NL) channel-major; whole length-L segments

    # Lane position inside its own length-L segment (one segment == one batch element).
    pos = jax.lax.broadcasted_iota(jnp.int32, (1, NL), 1) % L

    # Per-shift validity mask: lane at position pos may read (pos + s) of ITS OWN segment.
    masks = {}
    def seg_mask(s):
        if s not in masks:
            masks[s] = (pos < (L - s)) if s > 0 else (pos >= (-s))
        return masks[s]

    # window(arr, s) == arr[:, j + s] when (pos + s) stays inside the segment, else 0.
    # Built with an XLU lane-rotate on the resident tile (no halo scratch, no reload);
    # wrap-around lanes are exactly the out-of-segment ones, which the mask zeroes.
    # Windows/masks are cached so conv1/conv2/conv3 share identical shifts; shift 0 unmasked.
    wins = {}
    def window(arr, s, tag):
        key = (tag, s)
        if key not in wins:
            if s == 0:
                wins[key] = arr
            else:
                rolled = pltpu.roll(arr, (-s) % NL, axis=1)
                wins[key] = jnp.where(seg_mask(s), rolled, 0.0)
        return wins[key]

    # ---- conv1 (and conv3 when fused): K tap windows stacked in registers -> ONE MXU matmul.
    shifts1 = [t * d - pad1 for t in range(K)]
    slab1 = jnp.concatenate([window(x, s, "x") for s in shifts1], axis=0)   # (K*C_in_p, NL)
    y1 = jnp.dot(w1_ref[...], slab1, preferred_element_type=jnp.float32)
    if fuse13:
        # d == 1: conv1 and conv3 share the same shifts -> one fused (2*C_out_p, K*C_in_p) dot.
        r1 = jnp.maximum(y1[:C_out_p] + b1_ref[...], 0.0)
        shortcut = y1[C_out_p:] + b3_ref[...]
    else:
        r1 = jnp.maximum(y1 + b1_ref[...], 0.0)
        if use_conv3:
            shifts3 = [t - pad3 for t in range(K)]
            slab3 = jnp.concatenate([window(x, s, "x") for s in shifts3], axis=0)
            shortcut = jnp.dot(w3_ref[...], slab3,
                               preferred_element_type=jnp.float32) + b3_ref[...]
        else:
            shortcut = x               # C_in == C_out -> identity shortcut

    # ---- conv2: C_out -> 1 channel, kernel 3, dilation d.
    shifts2 = [t * d - pad2 for t in range(3)]
    if conv2_on_mxu:
        # Large C_out: one MXU matmul against a 3-tap stacked r1 slab (weights in row 0).
        slab2 = jnp.concatenate([window(r1, s, "r1") for s in shifts2], axis=0)
        r2 = jnp.dot(w2_ref[...], slab2, preferred_element_type=jnp.float32)[0:1, :]
    else:
        # Small C_out: VPU broadcast-mul + XLU sublane reduce (an M=1 MXU matmul is wasted).
        r2 = jnp.zeros((1, NL), jnp.float32)
        for t, s in enumerate(shifts2):
            w2_t = w2_ref[t * C_out_p:(t + 1) * C_out_p, :]                 # (C_out_p, 1)
            r2 = r2 + jnp.sum(window(r1, s, "r1") * w2_t, axis=0, keepdims=True)
    r2 = r2 + b2_ref[0]                # scalar bias from SMEM

    out_ref[...] = jnp.maximum(r2 + shortcut, 0.0)     # (1,NL) broadcasts over (C_out_p,NL)


def resblock_forward(x, params, kernel_size, dilation_rate):
    """x: (N, C_in, L) float32. params in PyTorch Conv1d layout:
       w1 (C_out, C_in, K), b1 (C_out,), w2 (1, C_out, 3), b2 (1,), w3 (C_out, C_in, K), b3 (C_out,)."""
    w1, b1, w2, b2, w3, b3 = params
    N, C_in, L = x.shape
    C_out = w1.shape[0]
    K, d = kernel_size, dilation_rate
    if K % 2 == 0:
        # PyTorch 'same' padding is asymmetric for even kernels; not supported here.
        raise NotImplementedError("kernel_size must be odd")
    if d < 1:
        raise ValueError("dilation_rate must be >= 1")

    pad1 = d * (K - 1) // 2            # 'same' reach of conv1
    pad2 = d                           # 'same' reach of conv2 (kernel 3)
    pad3 = (K - 1) // 2                # 'same' reach of conv3 (dilation 1)
    use_conv3 = (C_in != C_out)
    fuse13 = use_conv3 and (d == 1)    # identical tap shifts -> fuse conv1+conv3 into one dot
    sep3 = use_conv3 and not fuse13

    # Sublane-align channel dims (dense stores / full vregs).
    C_in_p = _round_up(C_in, 8)
    C_out_p = _round_up(C_out, 8)
    conv2_on_mxu = C_out_p >= 64       # below this the VPU/XLU reduce wins

    # --- tile sizing from an explicit VMEM budget (f32 words of working set per lane) ---
    per_lane_words = (2 * C_in_p + 2 * C_out_p                     # double-buffered in/out blocks
                      + C_in_p + (2 if sep3 else 1) * K * C_in_p   # x + register tap slab(s)
                      + 5 * C_out_p + 8)                           # r1, rolled windows, shortcut
    S = _pick_segments_per_tile(N, L, 4 * per_lane_words, _TILE_VMEM_BUDGET_BYTES)
    NL_t = S * L                       # lanes per grid step (multiple of 128 on the dense path)
    grid_n = -(-N // S)
    N_pad = grid_n * S

    # --- host-side layout plumbing: pad + channel-major lane-dense slab ---
    xf = x.astype(jnp.float32)
    x_pad = jnp.pad(xf, ((0, N_pad - N), (0, C_in_p - C_in), (0, 0)))
    x2d = jnp.transpose(x_pad, (1, 0, 2)).reshape(C_in_p, N_pad * L)   # x2d[c, n*L + l]

    def flat_w(w):                     # (C_out, C_in, K) -> (C_out_p, K*C_in_p), tap-major cols
        wp = jnp.pad(w.astype(jnp.float32),
                     ((0, C_out_p - C_out), (0, C_in_p - C_in), (0, 0)))
        return jnp.transpose(wp, (0, 2, 1)).reshape(C_out_p, K * C_in_p)

    w1f = flat_w(w1)
    w3f = flat_w(w3)
    w1_pass = jnp.concatenate([w1f, w3f], axis=0) if fuse13 else w1f
    b1c = jnp.pad(b1.astype(jnp.float32), (0, C_out_p - C_out)).reshape(C_out_p, 1)
    b3c = jnp.pad(b3.astype(jnp.float32), (0, C_out_p - C_out)).reshape(C_out_p, 1)

    w2p = jnp.pad(w2.astype(jnp.float32), ((0, 0), (0, C_out_p - C_out), (0, 0)))
    w2flat = jnp.transpose(w2p, (2, 1, 0)).reshape(3 * C_out_p)        # idx = t*C_out_p + c
    if conv2_on_mxu:
        w2m = jnp.zeros((8, 3 * C_out_p), jnp.float32).at[0].set(w2flat)   # MXU row form
    else:
        w2m = w2flat.reshape(3 * C_out_p, 1)                               # VPU column form
    b2s = b2.reshape(1).astype(jnp.float32)                                # scalar -> SMEM

    kernel = functools.partial(
        _resblock_kernel, K=K, d=d, L=L, C_out_p=C_out_p,
        pad1=pad1, pad2=pad2, pad3=pad3,
        use_conv3=use_conv3, fuse13=fuse13, conv2_on_mxu=conv2_on_mxu)

    out2d = pl.pallas_call(
        kernel,
        out_shape=jax.ShapeDtypeStruct((C_out_p, N_pad * L), jnp.float32),
        grid_spec=pltpu.PrefetchScalarGridSpec(
            num_scalar_prefetch=0,
            grid=(grid_n,),
            in_specs=[
                pl.BlockSpec((C_in_p, NL_t), lambda i: (0, i)),          # x tile (lane-dense)
                pl.BlockSpec(w1_pass.shape, lambda i: (0, 0)),           # w1 (+w3 when fused)
                pl.BlockSpec((C_out_p, 1), lambda i: (0, 0)),            # b1
                pl.BlockSpec(w2m.shape, lambda i: (0, 0)),               # w2 (row or column form)
                pl.BlockSpec(memory_space=pltpu.MemorySpace.SMEM),       # b2 scalar in SMEM
                pl.BlockSpec((C_out_p, K * C_in_p), lambda i: (0, 0)),   # w3 (unused if fused/id)
                pl.BlockSpec((C_out_p, 1), lambda i: (0, 0)),            # b3
            ],
            out_specs=pl.BlockSpec((C_out_p, NL_t), lambda i: (0, i)),
        ),
        compiler_params=pltpu.CompilerParams(
            dimension_semantics=("parallel",),
            vmem_limit_bytes=_VMEM_LIMIT_BYTES),
    )(x2d, w1_pass, b1c, w2m, b2s, w3f, b3c)

    # Back to the module's (N, C_out, L) layout; drop channel/batch padding (layout plumbing).
    out = jnp.transpose(out2d.reshape(C_out_p, N_pad, L), (1, 0, 2))
    return out[:N, :C_out, :]


# ---------------- pure-JAX reference (mirrors the PyTorch forward) ----------------
def _conv1d_same_ref(x, w, b, dilation):
    K = w.shape[-1]
    pad = dilation * (K - 1) // 2
    y = jax.lax.conv_general_dilated(
        x, w, window_strides=(1,), padding=[(pad, pad)],
        rhs_dilation=(dilation,), dimension_numbers=('NCH', 'OIH', 'NCH'))
    return y + b[None, :, None]


def resblock_ref(x, params, kernel_size, dilation_rate):
    w1, b1, w2, b2, w3, b3 = params
    r = jax.nn.relu(_conv1d_same_ref(x, w1, b1, dilation_rate))
    r = _conv1d_same_ref(r, w2, b2, dilation_rate)
    shortcut = x if x.shape[1] == w1.shape[0] else _conv1d_same_ref(x, w3, b3, 1)
    return jax.nn.relu(r + shortcut)


def _make_params(key, c_in, c_out, K):
    ks = jax.random.split(key, 6)
    w1 = 0.2 * jax.random.normal(ks[0], (c_out, c_in, K), jnp.float32)
    b1 = 0.1 * jax.random.normal(ks[1], (c_out,), jnp.float32)
    w2 = 0.2 * jax.random.normal(ks[2], (1, c_out, 3), jnp.float32)
    b2 = 0.1 * jax.random.normal(ks[3], (1,), jnp.float32)
    w3 = 0.2 * jax.random.normal(ks[4], (c_out, c_in, K), jnp.float32)
    b3 = 0.1 * jax.random.normal(ks[5], (c_out,), jnp.float32)
    return (w1, b1, w2, b2, w3, b3)


if __name__ == "__main__":
    key = jax.random.PRNGKey(0)
    keys = jax.random.split(key, 4)

    cases = [
        # (c_in, c_out, K, d, N, L)
        (4, 8, 3, 2, 2, 16),    # conv3 shortcut (separate, d>1), VPU conv2, channel padding
        (8, 8, 3, 1, 4, 16),    # identity shortcut
        (16, 64, 5, 1, 6, 64),  # fused conv1+conv3, MXU conv2, 2 grid steps, batch padding
        (8, 64, 3, 4, 4, 128),  # separate conv3 (d>1), MXU conv2, 2 grid steps
    ]
    for idx, (ci, co, K, d, N, L) in enumerate(cases):
        kp, kx = jax.random.split(keys[idx], 2)
        params = _make_params(kp, ci, co, K)
        x = jax.random.normal(kx, (N, ci, L), jnp.float32)

        out = jax.block_until_ready(resblock_forward(x, params, K, d))
        ref = resblock_ref(x, params, K, d)
        assert out.shape == ref.shape == (N, co, L), (idx, out.shape, ref.shape)
        err = float(jnp.abs(out - ref).max())
        assert jnp.allclose(out, ref, atol=1e-3, rtol=1e-3), (idx, err)

    print("KERNEL_OK")
</pallas_src>

<mosaic_0001>
module attributes {stable_mosaic.version = 11 : i64} {
  func.func @_resblock_kernel(%arg0: i32, %arg1: memref<8x128xf32, #tpu.memory_space<vmem>>, %arg2: memref<8x24xf32, #tpu.memory_space<vmem>>, %arg3: memref<8x1xf32, #tpu.memory_space<vmem>>, %arg4: memref<24x1xf32, #tpu.memory_space<vmem>>, %arg5: memref<1xf32, #tpu.memory_space<smem>>, %arg6: memref<8x24xf32, #tpu.memory_space<vmem>>, %arg7: memref<8x1xf32, #tpu.memory_space<vmem>>, %arg8: memref<8x128xf32, #tpu.memory_space<vmem>>) attributes {dimension_semantics = [#tpu.dimension_semantics<parallel>], iteration_bounds = array<i64: 1>, scalar_prefetch = 0 : i64, scratch_operands = 0 : i64, tpu.core_type = #tpu.core_type<tc>, window_params = [{transform_indices = @transform_0, window_bounds = array<i64: 8, 128>}, {pipeline_mode = #tpu.pipeline_mode<synchronous>, transform_indices = @transform_1, window_bounds = array<i64: 8, 24>}, {pipeline_mode = #tpu.pipeline_mode<synchronous>, transform_indices = @transform_2, window_bounds = array<i64: 8, 1>}, {pipeline_mode = #tpu.pipeline_mode<synchronous>, transform_indices = @transform_3, window_bounds = array<i64: 24, 1>}, {transform_indices = @transform_4, window_bounds = array<i64: 1>}, {pipeline_mode = #tpu.pipeline_mode<synchronous>, transform_indices = @transform_5, window_bounds = array<i64: 8, 24>}, {pipeline_mode = #tpu.pipeline_mode<synchronous>, transform_indices = @transform_6, window_bounds = array<i64: 8, 1>}, {transform_indices = @transform_7, window_bounds = array<i64: 8, 128>}]} {
    %c0 = arith.constant 0 : index
    %c0_0 = arith.constant 0 : index
    %0 = vector.load %arg1[%c0, %c0_0] : memref<8x128xf32, #tpu.memory_space<vmem>>, vector<8x128xf32>
    %1 = tpu.iota {dimensions = array<i32: 1>} : vector<1x128xi32>
    %c16_i32 = arith.constant 16 : i32
    %c0_i32 = arith.constant 0 : i32
    %2 = arith.cmpi eq, %c16_i32, %c0_i32 : i32
    %c1_i32 = arith.constant 1 : i32
    %3 = arith.select %2, %c1_i32, %c16_i32 : i32
    %4 = vector.broadcast %3 : i32 to vector<1x128xi32>
    %5 = arith.remsi %1, %4 : vector<1x128xi32>
    %c0_i32_1 = arith.constant 0 : i32
    %6 = vector.broadcast %c0_i32_1 : i32 to vector<1x128xi32>
    %7 = arith.cmpi ne, %5, %6 : vector<1x128xi32>
    %c0_i32_2 = arith.constant 0 : i32
    %8 = vector.broadcast %c0_i32_2 : i32 to vector<1x128xi32>
    %9 = arith.cmpi slt, %5, %8 : vector<1x128xi32>
    %c0_i32_3 = arith.constant 0 : i32
    %10 = arith.cmpi slt, %3, %c0_i32_3 : i32
    %11 = vector.broadcast %10 : i1 to vector<1x128xi1>
    %12 = vector.broadcast %11 : vector<1x128xi1> to vector<1x128xi1>
    %13 = arith.xori %9, %12 : vector<1x128xi1>
    %14 = arith.andi %13, %7 : vector<1x128xi1>
    %15 = vector.broadcast %3 : i32 to vector<1x128xi32>
    %16 = arith.addi %5, %15 : vector<1x128xi32>
    %17 = arith.select %14, %16, %5 : vector<1x128xi1>, vector<1x128xi32>
    %c2_i32 = arith.constant 2 : i32
    %18 = tpu.dynamic_rotate %0 by %c2_i32 dim 1 : vector<8x128xf32>, i32 -> vector<8x128xf32>
    %c2_i32_4 = arith.constant 2 : i32
    %19 = vector.broadcast %c2_i32_4 : i32 to vector<1x128xi32>
    %20 = arith.cmpi sge, %17, %19 : vector<1x128xi32>
    %cst = arith.constant 0.000000e+00 : f32
    %21 = vector.shape_cast %20 : vector<1x128xi1> to vector<1x128xi1>
    %22 = vector.broadcast %21 : vector<1x128xi1> to vector<8x128xi1>
    %23 = vector.broadcast %cst : f32 to vector<8x128xf32>
    %24 = arith.select %22, %18, %23 : vector<8x128xi1>, vector<8x128xf32>
    %c126_i32 = arith.constant 126 : i32
    %25 = tpu.dynamic_rotate %0 by %c126_i32 dim 1 : vector<8x128xf32>, i32 -> vector<8x128xf32>
    %c14_i32 = arith.constant 14 : i32
    %26 = vector.broadcast %c14_i32 : i32 to vector<1x128xi32>
    %27 = arith.cmpi slt, %17, %26 : vector<1x128xi32>
    %cst_5 = arith.constant 0.000000e+00 : f32
    %28 = vector.shape_cast %27 : vector<1x128xi1> to vector<1x128xi1>
    %29 = vector.broadcast %28 : vector<1x128xi1> to vector<8x128xi1>
    %30 = vector.broadcast %cst_5 : f32 to vector<8x128xf32>
    %31 = arith.select %29, %25, %30 : vector<8x128xi1>, vector<8x128xf32>
    %32 = tpu.concatenate %24, %0, %31 in 0 : vector<8x128xf32>, vector<8x128xf32>, vector<8x128xf32> -> vector<24x128xf32>
    %c0_6 = arith.constant 0 : index
    %c0_7 = arith.constant 0 : index
    %33 = vector.load %arg2[%c0_6, %c0_7] : memref<8x24xf32, #tpu.memory_space<vmem>>, vector<8x24xf32>
    %cst_8 = arith.constant dense<0.000000e+00> : vector<8x128xf32>
    %34 = tpu.matmul %33, %32, %cst_8 {dimension_numbers = #tpu.dot_dimension_numbers<[1], [0], [0], [1], [0, 0, 1, 1], [], []>} : vector<8x24xf32>, vector<24x128xf32>, vector<8x128xf32> -> vector<8x128xf32>
    %c0_9 = arith.constant 0 : index
    %c0_10 = arith.constant 0 : index
    %35 = vector.load %arg3[%c0_9, %c0_10] : memref<8x1xf32, #tpu.memory_space<vmem>>, vector<8x1xf32>
    %36 = vector.broadcast %35 : vector<8x1xf32> to vector<8x128xf32>
    %37 = arith.addf %34, %36 : vector<8x128xf32>
    %cst_11 = arith.constant 0.000000e+00 : f32
    %38 = vector.broadcast %cst_11 : f32 to vector<8x128xf32>
    %39 = arith.maximumf %37, %38 : vector<8x128xf32>
    %c1_i32_12 = arith.constant 1 : i32
    %40 = tpu.dynamic_rotate %0 by %c1_i32_12 dim 1 : vector<8x128xf32>, i32 -> vector<8x128xf32>
    %c1_i32_13 = arith.constant 1 : i32
    %41 = vector.broadcast %c1_i32_13 : i32 to vector<1x128xi32>
    %42 = arith.cmpi sge, %17, %41 : vector<1x128xi32>
    %cst_14 = arith.constant 0.000000e+00 : f32
    %43 = vector.shape_cast %42 : vector<1x128xi1> to vector<1x128xi1>
    %44 = vector.broadcast %43 : vector<1x128xi1> to vector<8x128xi1>
    %45 = vector.broadcast %cst_14 : f32 to vector<8x128xf32>
    %46 = arith.select %44, %40, %45 : vector<8x128xi1>, vector<8x128xf32>
    %c127_i32 = arith.constant 127 : i32
    %47 = tpu.dynamic_rotate %0 by %c127_i32 dim 1 : vector<8x128xf32>, i32 -> vector<8x128xf32>
    %c15_i32 = arith.constant 15 : i32
    %48 = vector.broadcast %c15_i32 : i32 to vector<1x128xi32>
    %49 = arith.cmpi slt, %17, %48 : vector<1x128xi32>
    %cst_15 = arith.constant 0.000000e+00 : f32
    %50 = vector.shape_cast %49 : vector<1x128xi1> to vector<1x128xi1>
    %51 = vector.broadcast %50 : vector<1x128xi1> to vector<8x128xi1>
    %52 = vector.broadcast %cst_15 : f32 to vector<8x128xf32>
    %53 = arith.select %51, %47, %52 : vector<8x128xi1>, vector<8x128xf32>
    %54 = tpu.concatenate %46, %0, %53 in 0 : vector<8x128xf32>, vector<8x128xf32>, vector<8x128xf32> -> vector<24x128xf32>
    %c0_16 = arith.constant 0 : index
    %c0_17 = arith.constant 0 : index
    %55 = vector.load %arg6[%c0_16, %c0_17] : memref<8x24xf32, #tpu.memory_space<vmem>>, vector<8x24xf32>
    %cst_18 = arith.constant dense<0.000000e+00> : vector<8x128xf32>
    %56 = tpu.matmul %55, %54, %cst_18 {dimension_numbers = #tpu.dot_dimension_numbers<[1], [0], [0], [1], [0, 0, 1, 1], [], []>} : vector<8x24xf32>, vector<24x128xf32>, vector<8x128xf32> -> vector<8x128xf32>
    %c0_19 = arith.constant 0 : index
    %c0_20 = arith.constant 0 : index
    %57 = vector.load %arg7[%c0_19, %c0_20] : memref<8x1xf32, #tpu.memory_space<vmem>>, vector<8x1xf32>
    %58 = vector.broadcast %57 : vector<8x1xf32> to vector<8x128xf32>
    %59 = arith.addf %56, %58 : vector<8x128xf32>
    %cst_21 = arith.constant 0.000000e+00 : f32
    %60 = vector.broadcast %cst_21 : f32 to vector<1x128xf32>
    %c0_22 = arith.constant 0 : index
    %c0_23 = arith.constant 0 : index
    %61 = vector.load %arg4[%c0_22, %c0_23] : memref<24x1xf32, #tpu.memory_space<vmem>>, vector<8x1xf32>
    %c2_i32_24 = arith.constant 2 : i32
    %62 = tpu.dynamic_rotate %39 by %c2_i32_24 dim 1 : vector<8x128xf32>, i32 -> vector<8x128xf32>
    %cst_25 = arith.constant 0.000000e+00 : f32
    %63 = vector.shape_cast %20 : vector<1x128xi1> to vector<1x128xi1>
    %64 = vector.broadcast %63 : vector<1x128xi1> to vector<8x128xi1>
    %65 = vector.broadcast %cst_25 : f32 to vector<8x128xf32>
    %66 = arith.select %64, %62, %65 : vector<8x128xi1>, vector<8x128xf32>
    %67 = vector.broadcast %61 : vector<8x1xf32> to vector<8x128xf32>
    %68 = arith.mulf %66, %67 : vector<8x128xf32>
    %cst_26 = arith.constant dense<0.000000e+00> : vector<128xf32>
    %69 = vector.multi_reduction <add>, %68, %cst_26 [0] : vector<8x128xf32> to vector<128xf32>
    %70 = vector.shape_cast %69 : vector<128xf32> to vector<1x128xf32>
    %71 = arith.addf %60, %70 : vector<1x128xf32>
    %c8 = arith.constant 8 : index
    %c0_27 = arith.constant 0 : index
    %72 = vector.load %arg4[%c8, %c0_27] : memref<24x1xf32, #tpu.memory_space<vmem>>, vector<8x1xf32>
    %73 = vector.broadcast %72 : vector<8x1xf32> to vector<8x128xf32>
    %74 = arith.mulf %39, %73 : vector<8x128xf32>
    %cst_28 = arith.constant dense<0.000000e+00> : vector<128xf32>
    %75 = vector.multi_reduction <add>, %74, %cst_28 [0] : vector<8x128xf32> to vector<128xf32>
    %76 = vector.shape_cast %75 : vector<128xf32> to vector<1x128xf32>
    %77 = arith.addf %71, %76 : vector<1x128xf32>
    %c16 = arith.constant 16 : index
    %c0_29 = arith.constant 0 : index
    %78 = vector.load %arg4[%c16, %c0_29] : memref<24x1xf32, #tpu.memory_space<vmem>>, vector<8x1xf32>
    %c126_i32_30 = arith.constant 126 : i32
    %79 = tpu.dynamic_rotate %39 by %c126_i32_30 dim 1 : vector<8x128xf32>, i32 -> vector<8x128xf32>
    %cst_31 = arith.constant 0.000000e+00 : f32
    %80 = vector.shape_cast %27 : vector<1x128xi1> to vector<1x128xi1>
    %81 = vector.broadcast %80 : vector<1x128xi1> to vector<8x128xi1>
    %82 = vector.broadcast %cst_31 : f32 to vector<8x128xf32>
    %83 = arith.select %81, %79, %82 : vector<8x128xi1>, vector<8x128xf32>
    %84 = vector.broadcast %78 : vector<8x1xf32> to vector<8x128xf32>
    %85 = arith.mulf %83, %84 : vector<8x128xf32>
    %cst_32 = arith.constant dense<0.000000e+00> : vector<128xf32>
    %86 = vector.multi_reduction <add>, %85, %cst_32 [0] : vector<8x128xf32> to vector<128xf32>
    %87 = vector.shape_cast %86 : vector<128xf32> to vector<1x128xf32>
    %88 = arith.addf %77, %87 : vector<1x128xf32>
    %c0_33 = arith.constant 0 : index
    %89 = memref.load %arg5[%c0_33] : memref<1xf32, #tpu.memory_space<smem>>
    %90 = vector.broadcast %89 : f32 to vector<1x128xf32>
    %91 = arith.addf %88, %90 : vector<1x128xf32>
    %92 = vector.broadcast %91 : vector<1x128xf32> to vector<8x128xf32>
    %93 = arith.addf %92, %59 : vector<8x128xf32>
    %cst_34 = arith.constant 0.000000e+00 : f32
    %94 = vector.broadcast %cst_34 : f32 to vector<8x128xf32>
    %95 = arith.maximumf %93, %94 : vector<8x128xf32>
    %c0_35 = arith.constant 0 : index
    %c0_36 = arith.constant 0 : index
    %96 = vector.load %arg8[%c0_35, %c0_36] : memref<8x128xf32, #tpu.memory_space<vmem>>, vector<8x128xf32>
    tpu.vector_store %arg8[%c0_35, %c0_36], %95 {strides = array<i32>} : memref<8x128xf32, #tpu.memory_space<vmem>>, vector<8x128xf32>,
    return
  }
  func.func @transform_0(%arg0: i32) -> (i32, i32) {
    %c0_i32 = arith.constant 0 : i32
    %c0_i32_0 = arith.constant 0 : i32
    return %c0_i32, %arg0 : i32, i32
  }
  func.func @transform_1(%arg0: i32) -> (i32, i32) {
    %c0_i32 = arith.constant 0 : i32
    %c0_i32_0 = arith.constant 0 : i32
    %c0_i32_1 = arith.constant 0 : i32
    return %c0_i32, %c0_i32_0 : i32, i32
  }
  func.func @transform_2(%arg0: i32) -> (i32, i32) {
    %c0_i32 = arith.constant 0 : i32
    %c0_i32_0 = arith.constant 0 : i32
    %c0_i32_1 = arith.constant 0 : i32
    return %c0_i32, %c0_i32_0 : i32, i32
  }
  func.func @transform_3(%arg0: i32) -> (i32, i32) {
    %c0_i32 = arith.constant 0 : i32
    %c0_i32_0 = arith.constant 0 : i32
    %c0_i32_1 = arith.constant 0 : i32
    return %c0_i32, %c0_i32_0 : i32, i32
  }
  func.func @transform_4(%arg0: i32) -> i32 {
    %c0_i32 = arith.constant 0 : i32
    %c0_i32_0 = arith.constant 0 : i32
    return %c0_i32 : i32
  }
  func.func @transform_5(%arg0: i32) -> (i32, i32) {
    %c0_i32 = arith.constant 0 : i32
    %c0_i32_0 = arith.constant 0 : i32
    %c0_i32_1 = arith.constant 0 : i32
    return %c0_i32, %c0_i32_0 : i32, i32
  }
  func.func @transform_6(%arg0: i32) -> (i32, i32) {
    %c0_i32 = arith.constant 0 : i32
    %c0_i32_0 = arith.constant 0 : i32
    %c0_i32_1 = arith.constant 0 : i32
    return %c0_i32, %c0_i32_0 : i32, i32
  }
  func.func @transform_7(%arg0: i32) -> (i32, i32) {
    %c0_i32 = arith.constant 0 : i32
    %c0_i32_0 = arith.constant 0 : i32
    return %c0_i32, %arg0 : i32, i32
  }
}

</mosaic_0001>

<llo_original>
// kernel: tpu_custom_call.1
$region0: #{tpu_custom_call.1}
  #allocation0 [shape = 'u32[]', space=smem, size = 0x4, offset = 0x4, fixed_abs, tag = 'smem constant byte address 0x4 - core index']
  #allocation1 [shape = 'u32[144,128]{1,0:T(1,128)}', space=vmem, size = 0x12000, scoped, tag = 'internal scratch']
  #allocation2 [shape = 'f32[1]{0:T(128)S(6)}', space=smem, size = 0x200, scoped, tag = 'scoped memory for tpu_custom_call.1']
  %s0 = inlined_call_operand.vmem [shape: f32[8,128], index: 0, kind: input, shape index: {}]
  %s1 = inlined_call_operand.vmem [shape: f32[8,24], index: 1, kind: input, shape index: {}]
  %s2 = inlined_call_operand.vmem [shape: f32[8,1], index: 2, kind: input, shape index: {}]
  %s3 = inlined_call_operand.vmem [shape: f32[24,1], index: 3, kind: input, shape index: {}]
  %s4 = inlined_call_operand.<no memory space> [shape: f32[1], index: 4, kind: input, shape index: {}]
  %s5 = inlined_call_operand.vmem [shape: f32[8,24], index: 5, kind: input, shape index: {}]
  %s6 = inlined_call_operand.vmem [shape: f32[8,1], index: 6, kind: input, shape index: {}]
  %s7 = inlined_call_operand.hbm [shape: f32[8,128], index: 7, kind: output, shape index: {}]
  %s8 = sld [smem:[#allocation0]]
  $region38: #{tpu_custom_call.1} parent=0
    _
  %s10 = ssub.s32 1, %s8
  %s11 = scalar_select 0, %s10, %s8
  %12 = sst [smem:[#allocation2]] %s4
  $region1: #{tpu_custom_call.1} parent=0
    #allocation3 [shape = 'u8[4096]{0}', space=vmem, size = 0x1000, scoped, tag = 'output window, operand 0, single buffered']
    #allocation4 [shape = 's32[1]{0}', space=sflag, size = 0x4, scoped, tag = 'scoped memory for tpu_custom_call.1']
    %13 = vsyncpa [#allocation4], 0
    // Predicated region
    $region2: #{tpu_custom_call.1} parent=1 // pred_check
      _
    $region3: #{tpu_custom_call.1} parent=1 // pred_check_branch
      %15 = sbr.rel (0) target = $region5
    $region4: #{tpu_custom_call.1} parent=1 // pred_region
      _
    $region5: #{tpu_custom_call.1} parent=1 // pred_fallthru
      _
    // Predicated region
    $region6: #{tpu_custom_call.1} parent=1 // pred_check
      _
    $region7: #{tpu_custom_call.1} parent=1 // pred_check_branch
      %17 = sbr.rel (0) target = $region9
    $region8: #{tpu_custom_call.1} parent=1 // pred_region
      _
    $region9: #{tpu_custom_call.1} parent=1 // pred_fallthru
      _
    // Predicated region
    $region10: #{tpu_custom_call.1} parent=1 // pred_check
      _
    $region11: #{tpu_custom_call.1} parent=1 // pred_check_branch
      %19 = sbr.rel (0) target = $region13
    $region12: #{tpu_custom_call.1} parent=1 // pred_region
      _
    $region13: #{tpu_custom_call.1} parent=1 // pred_fallthru
      _
    // Predicated region
    $region14: #{tpu_custom_call.1} parent=1 // pred_check
      _
    $region15: #{tpu_custom_call.1} parent=1 // pred_check_branch
      %21 = sbr.rel (0) target = $region17
    $region16: #{tpu_custom_call.1} parent=1 // pred_region
      _
    $region17: #{tpu_custom_call.1} parent=1 // pred_fallthru
      _
    // Predicated region
    $region18: #{tpu_custom_call.1} parent=1 // pred_check
      _
    $region19: #{tpu_custom_call.1} parent=1 // pred_check_branch
      %23 = sbr.rel (0) target = $region21
    $region20: #{tpu_custom_call.1} parent=1 // pred_region
      _
    $region21: #{tpu_custom_call.1} parent=1 // pred_fallthru
      _
    // Predicated region
    $region22: #{tpu_custom_call.1} parent=1 // pred_check
      _
    $region23: #{tpu_custom_call.1} parent=1 // pred_check_branch
      %25 = sbr.rel (0) target = $region25
    $region24: #{tpu_custom_call.1} parent=1 // pred_region
      _
    $region25: #{tpu_custom_call.1} parent=1 // pred_fallthru
      _
    // Predicated region
    $region26: #{tpu_custom_call.1} parent=1 // pred_check
      _
    $region27: #{tpu_custom_call.1} parent=1 // pred_check_branch
      %27 = sbr.rel (0) target = $region29
    $region28: #{tpu_custom_call.1} parent=1 // pred_region
      _
    $region29: #{tpu_custom_call.1} parent=1 // pred_fallthru
      _
    %v28 = vld [vmem:[%s0] sm:$0xff]
    %v29 = vlaneseq
    %v30 = vand.u32 %v29, 127
    %vm31 = vcmp.lt.s32.totalorder %v30, 0
    %v32 = vsub.s32 0, %v30
    %v33 = vsel %vm31, %v32, %v30
    %v34 = vshrl.u32 %v33, 4
    %v35 = vand.u32 %v33, 15
    %v36 = vsub.s32 0, %v35
    %v37 = vsel %vm31, %v36, %v35
    %vm38 = vcmp.ne.s32.totalorder %v37, 0
    %vm39 = vcmp.lt.s32.totalorder %v37, 0
    %vm40 = vmand %vm39, %vm38
    %v41 = vadd.s32 %v37, 16
    %v42 = vsel %vm40, %v41, %v37
    %43 = vrot.lane.b32.xlu0 %v28, 2
    %v44 = vpop.permute.xlu0 %43
    %vm45 = vcmp.ge.s32.totalorder %v42, 2
    %v46 = vsel %vm45, 1, 0
    %vm47 = vcmp.eq.s32.totalorder %v46, 1
    %v48 = vsel %vm47, %v44, 0.0
    %49 = vrot.lane.b32.xlu0 %v28, 126
    %v50 = vpop.permute.xlu0 %49
    %vm51 = vcmp.lt.s32.totalorder %v42, 14
    %v52 = vsel %vm51, 1, 0
    %vm53 = vcmp.eq.s32.totalorder %v52, 1
    %v54 = vsel %vm53, %v50, 0.0
    %v55 = vld [vmem:[%s1] sm:$0xff]
    %v56 = vld [vmem:[%s2] sm:$0xff]
    %58 = vset.pattern.permute.xlu0 0
    %59 = vperm.xlu0 %58, %v56
    %v60 = vpop.permute.xlu0 %59
    %vm62 = vcmask 195584
    %v64 = vsel %vm62, %v55, 0
    %66 = vmatprep.subr.mxu0 0.0
    %67 = vmatpush1.msra.mxu0 %v48
    %68 = vmatprep.subr.mxu0 0.0
    %69 = vmatpush1.msra.mxu0 %v28
    %70 = vmatprep.subr.mxu0 0.0
    %71 = vmatpush1.msra.mxu0 %v54
    %72 = vmatprep.subr.mxu0 0.0
    %73 = vmatpush1.msra.mxu0 0.0
    %74 = vmatprep.subr.mxu0 0.0
    %75 = vmatpush1.msra.mxu0 0.0
    %76 = vmatprep.subr.mxu0 0.0
    %77 = vmatpush1.msra.mxu0 0.0
    %78 = vmatprep.subr.mxu0 0.0
    %79 = vmatpush1.msra.mxu0 0.0
    %80 = vmatprep.subr.mxu0 0.0
    %81 = vmatpush1.msra.mxu0 0.0
    %82 = vmatprep.subr.mxu0 0.0
    %83 = vmatpush1.msra.mxu0 0.0
    %84 = vmatprep.subr.mxu0 0.0
    %85 = vmatpush1.msra.mxu0 0.0
    %86 = vmatprep.subr.mxu0 0.0
    %87 = vmatpush1.msra.mxu0 0.0
    %88 = vmatprep.subr.mxu0 0.0
    %89 = vmatpush1.msra.mxu0 0.0
    %90 = vmatprep.subr.mxu0 0.0
    %91 = vmatpush1.msra.mxu0 0.0
    %92 = vmatprep.subr.mxu0 0.0
    %93 = vmatpush1.msra.mxu0 0.0
    %94 = vmatprep.subr.mxu0 0.0
    %95 = vmatpush1.msra.mxu0 0.0
    %96 = vmatprep.subr.mxu0 0.0
    %97 = vmatpush1.msra.mxu0 0.0
    %98 = vmatprep.subr.mxu0 0.0
    %99 = vmatpush1.msra.mxu0 0.0
    %100 = vmatprep.subr.mxu0 0.0
    %101 = vmatpush1.msra.mxu0 0.0
    %102 = vmatprep.subr.mxu0 0.0
    %103 = vmatpush1.msra.mxu0 0.0
    %104 = vmatprep.subr.mxu0 0.0
    %105 = vmatpush1.msra.mxu0 0.0
    %106 = vmatprep.subr.mxu0 0.0
    %107 = vmatpush1.msra.mxu0 0.0
    %108 = vmatprep.subr.mxu0 0.0
    %109 = vmatpush1.msra.mxu0 0.0
    %110 = vmatprep.subr.mxu0 0.0
    %111 = vmatpush1.msra.mxu0 0.0
    %112 = vmatprep.subr.mxu0 0.0
    %113 = vmatpush1.msra.mxu0 0.0
    %114 = vmatprep.subr.mxu0 0.0
    %115 = vmatpush1.msra.mxu0 0.0
    %116 = vmatprep.subr.mxu0 0.0
    %117 = vmatpush1.msra.mxu0 0.0
    %118 = vmatprep.subr.mxu0 0.0
    %119 = vmatpush1.msra.mxu0 0.0
    %120 = vmatprep.subr.mxu0 0.0
    %121 = vmatpush1.msra.mxu0 0.0
    %122 = vmatprep.subr.mxu0 0.0
    %123 = vmatpush1.msra.mxu0 0.0
    %124 = vmatprep.subr.mxu0 0.0
    %125 = vmatpush1.msra.mxu0 0.0
    %126 = vmatprep.subr.mxu0 0.0
    %127 = vmatpush1.msra.mxu0 0.0
    %128 = vmatprep.subr.mxu0 0.0
    %129 = vmatpush1.msra.mxu0 0.0
    %130 = vmatprep.mubr.f32.mxu0 0.0
    %131 = vmatmul.mubr.f32.gmra.mrb[0].mxu0 %v64
    %v132 = vpop.f32.mrb[0].mxu0
    %v133 = vadd.f32 %v60, %v132
    %v134 = vpop.f32.mrb[0].mxu0
    %135 = vdwg.mxu0
    %v136 = vmax.f32 %v133, 0.0
    %137 = vrot.lane.b32.xlu0 %v28, 1
    %v138 = vpop.permute.xlu0 %137
    %vm139 = vcmp.ge.s32.totalorder %v42, 1
    %v140 = vsel %vm139, 1, 0
    %vm141 = vcmp.eq.s32.totalorder %v140, 1
    %v142 = vsel %vm141, %v138, 0.0
    %143 = vrot.lane.b32.xlu0 %v28, 127
    %v144 = vpop.permute.xlu0 %143
    %vm145 = vcmp.lt.s32.totalorder %v42, 15
    %v146 = vsel %vm145, 1, 0
    %vm147 = vcmp.eq.s32.totalorder %v146, 1
    %v148 = vsel %vm147, %v144, 0.0
    %v149 = vld [vmem:[%s5] sm:$0xff]
    %v150 = vld [vmem:[%s6] sm:$0xff]
    %152 = vset.pattern.permute.xlu0 0
    %153 = vperm.xlu0 %152, %v150
    %v154 = vpop.permute.xlu0 %153
    %v157 = vsel %vm62, %v149, 0
    %159 = vmatprep.subr.mxu0 0.0
    %160 = vmatpush1.msra.mxu0 %v142
    %161 = vmatprep.subr.mxu0 0.0
    %162 = vmatpush1.msra.mxu0 %v28
    %163 = vmatprep.subr.mxu0 0.0
    %164 = vmatpush1.msra.mxu0 %v148
    %165 = vmatprep.subr.mxu0 0.0
    %166 = vmatpush1.msra.mxu0 0.0
    %167 = vmatprep.subr.mxu0 0.0
    %168 = vmatpush1.msra.mxu0 0.0
    %169 = vmatprep.subr.mxu0 0.0
    %170 = vmatpush1.msra.mxu0 0.0
    %171 = vmatprep.subr.mxu0 0.0
    %172 = vmatpush1.msra.mxu0 0.0
    %173 = vmatprep.subr.mxu0 0.0
    %174 = vmatpush1.msra.mxu0 0.0
    %175 = vmatprep.subr.mxu0 0.0
    %176 = vmatpush1.msra.mxu0 0.0
    %177 = vmatprep.subr.mxu0 0.0
    %178 = vmatpush1.msra.mxu0 0.0
    %179 = vmatprep.subr.mxu0 0.0
    %180 = vmatpush1.msra.mxu0 0.0
    %181 = vmatprep.subr.mxu0 0.0
    %182 = vmatpush1.msra.mxu0 0.0
    %183 = vmatprep.subr.mxu0 0.0
    %184 = vmatpush1.msra.mxu0 0.0
    %185 = vmatprep.subr.mxu0 0.0
    %186 = vmatpush1.msra.mxu0 0.0
    %187 = vmatprep.subr.mxu0 0.0
    %188 = vmatpush1.msra.mxu0 0.0
    %189 = vmatprep.subr.mxu0 0.0
    %190 = vmatpush1.msra.mxu0 0.0
    %191 = vmatprep.subr.mxu0 0.0
    %192 = vmatpush1.msra.mxu0 0.0
    %193 = vmatprep.subr.mxu0 0.0
    %194 = vmatpush1.msra.mxu0 0.0
    %195 = vmatprep.subr.mxu0 0.0
    %196 = vmatpush1.msra.mxu0 0.0
    %197 = vmatprep.subr.mxu0 0.0
    %198 = vmatpush1.msra.mxu0 0.0
    %199 = vmatprep.subr.mxu0 0.0
    %200 = vmatpush1.msra.mxu0 0.0
    %201 = vmatprep.subr.mxu0 0.0
    %202 = vmatpush1.msra.mxu0 0.0
    %203 = vmatprep.subr.mxu0 0.0
    %204 = vmatpush1.msra.mxu0 0.0
    %205 = vmatprep.subr.mxu0 0.0
    %206 = vmatpush1.msra.mxu0 0.0
    %207 = vmatprep.subr.mxu0 0.0
    %208 = vmatpush1.msra.mxu0 0.0
    %209 = vmatprep.subr.mxu0 0.0
    %210 = vmatpush1.msra.mxu0 0.0
    %211 = vmatprep.subr.mxu0 0.0
    %212 = vmatpush1.msra.mxu0 0.0
    %213 = vmatprep.subr.mxu0 0.0
    %214 = vmatpush1.msra.mxu0 0.0
    %215 = vmatprep.subr.mxu0 0.0
    %216 = vmatpush1.msra.mxu0 0.0
    %217 = vmatprep.subr.mxu0 0.0
    %218 = vmatpush1.msra.mxu0 0.0
    %219 = vmatprep.subr.mxu0 0.0
    %220 = vmatpush1.msra.mxu0 0.0
    %221 = vmatprep.subr.mxu0 0.0
    %222 = vmatpush1.msra.mxu0 0.0
    %223 = vmatprep.mubr.f32.mxu0 0.0
    %224 = vmatmul.mubr.f32.gmra.mrb[0].mxu0 %v157
    %v225 = vpop.f32.mrb[0].mxu0
    %v226 = vadd.f32 %v154, %v225
    %v227 = vpop.f32.mrb[0].mxu0
    %228 = vdwg.mxu0
    %v229 = vld [vmem:[%s3] sm:$0xff]
    %230 = vrot.lane.b32.xlu0 %v136, 2
    %v231 = vpop.permute.xlu0 %230
    %v232 = vsel %vm47, %v231, 0.0
    %234 = vset.pattern.permute.xlu0 0
    %235 = vperm.xlu0 %234, %v229
    %v236 = vpop.permute.xlu0 %235
    %v238 = vmul.f32 %v232, %v236
    %v239 = vrot.slane %v238, 4
    %v240 = vadd.f32 %v238, %v239
    %v241 = vrot.slane %v240, 2
    %v242 = vadd.f32 %v240, %v241
    %v243 = vrot.slane %v242, 1
    %v244 = vadd.f32 %v242, %v243
    %v245 = vadd.f32 %v244, 0.0
    %v246 = vld [vmem:[%s3 + $0x8] sm:$0xff]
    %248 = vset.pattern.permute.xlu0 0
    %249 = vperm.xlu0 %248, %v246
    %v250 = vpop.permute.xlu0 %249
    %v252 = vmul.f32 %v136, %v250
    %v253 = vrot.slane %v252, 4
    %v254 = vadd.f32 %v252, %v253
    %v255 = vrot.slane %v254, 2
    %v256 = vadd.f32 %v254, %v255
    %v257 = vrot.slane %v256, 1
    %v258 = vadd.f32 %v256, %v257
    %v259 = vadd.f32 %v245, %v258
    %v260 = vld [vmem:[%s3 + $0x10] sm:$0xff]
    %261 = vrot.lane.b32.xlu0 %v136, 126
    %v262 = vpop.permute.xlu0 %261
    %v263 = vsel %vm53, %v262, 0.0
    %265 = vset.pattern.permute.xlu0 0
    %266 = vperm.xlu0 %265, %v260
    %v267 = vpop.permute.xlu0 %266
    %v269 = vmul.f32 %v263, %v267
    %v270 = vrot.slane %v269, 4
    %v271 = vadd.f32 %v269, %v270
    %v272 = vrot.slane %v271, 2
    %v273 = vadd.f32 %v271, %v272
    %v274 = vrot.slane %v273, 1
    %v275 = vadd.f32 %v273, %v274
    %v276 = vadd.f32 %v259, %v275
    %s277 = sld [smem:[#allocation2]]
    %v278 = vstv %s277
    %v279 = vadd.f32 %v276, %v278
    %v280 = vadd.f32 %v279, %v226
    %v281 = vmax.f32 %v280, 0.0
    %282 = vst [vmem:[#allocation3] sm:$0xff] %v281
    // Predicated region
    $region30: #{tpu_custom_call.1} parent=1 // pred_check
      _
    $region31: #{tpu_custom_call.1} parent=1 // pred_check_branch
      %284 = sbr.rel (0) target = $region33
    $region32: #{tpu_custom_call.1} parent=1 // pred_region
      %s286 = ssub.s32 128, 128
      %287 = vsyncadd [#allocation4], %s286
      %s289 = sshll.u32 [#allocation3], 4
      %s290 = int_to_ptr.vmem [resolvable:$true] %s289
      %292 = dma.vmem_to_hbm [thread:$0]  %s290, 128, %s7, [#allocation4]
    $region33: #{tpu_custom_call.1} parent=1 // pred_fallthru
      _
    // Predicated region
    $region34: #{tpu_custom_call.1} parent=1 // pred_check
      _
    $region35: #{tpu_custom_call.1} parent=1 // pred_check_branch
      %294 = sbr.rel (0) target = $region37
    $region36: #{tpu_custom_call.1} parent=1 // pred_region
      %295 = dma.done [#allocation4], 128
    $region37: #{tpu_custom_call.1} parent=1 // pred_fallthru
      _
    %296 = vsyncpa [#allocation4], 1

</llo_original>
